<compile_context>
chip_gen: v7x
topology: tpu7x:2x2x1
jax: 0.10.0
libtpu: 0.0.40
codegen_flags: <defaults>
</compile_context>

<pallas_src>
import functools

import jax
import jax.numpy as jnp
import numpy as np
from jax.experimental import pallas as pl
from jax.experimental.pallas import tpu as pltpu

LANE = 128
SUBLANE = 8


def _round_down(x, m):
    return (x // m) * m


def _round_up(x, m):
    return -(-x // m) * m


def _choose_tiles(B, S, V, itemsize=4, target_block_bytes=8 << 20):
    """Maximize the vocab tile first (lane-dense, contiguous writeback), then
    grow the seq tile to fill the VMEM budget.
    TS: multiple of 8 (or == S).  TV: multiple of 128 (or == V)."""
    ts_min = S if S < SUBLANE else SUBLANE
    if V <= LANE or B * ts_min * V * itemsize <= target_block_bytes:
        TV = V                                   # whole vocab resident per block
    else:
        cap = target_block_bytes // (B * ts_min * itemsize)
        TV = max(LANE, _round_down(cap, LANE))
        TV = min(TV, _round_down(V, LANE))
    if S <= SUBLANE or B * S * TV * itemsize <= target_block_bytes:
        TS = S
    else:
        TS = max(SUBLANE,
                 _round_down(target_block_bytes // (B * TV * itemsize), SUBLANE))
        TS = min(TS, S)
    return TS, TV


def _split_for_megacore(B, S, V, TS, TV, itemsize=4, min_total_bytes=1 << 20):
    """v7x has 2 TensorCores: avoid a single-step 'parallel' grid for non-trivial
    outputs so both cores get work.  Harmless no-op on v5e/v6e."""
    if B * S * V * itemsize < min_total_bytes:
        return TS, TV
    if pl.cdiv(S, TS) * pl.cdiv(V, TV) > 1:
        return TS, TV
    if S > SUBLANE:
        TS = max(SUBLANE, _round_up((S + 1) // 2, SUBLANE))
    elif V > LANE:
        TV = max(LANE, _round_up((V + 1) // 2, LANE))
    return TS, TV


def _mlm_logits_kernel(flags_ref, sel_ref, out_ref, *, num_v_tiles):
    """Fill a (B, TS, TV) vocab tile with -1 and scatter the target values.

    flags_ref : [num_s*num_v] int32 SMEM (scalar prefetch): nonzero iff this
                (seq-tile, vocab-tile) contains any target id at a masked pos.
    sel_ref   : (B, TS, T) int32: vocab id target t assigns at (b, s), or -1
                if (b, s) is not a masked position (sentinel).
    out_ref   : (B, TS, TV) float32 output tile.
    """
    B, TS, TV = out_ref.shape
    T = sel_ref.shape[-1]
    si = pl.program_id(0)
    vi = pl.program_id(1)
    flag = flags_ref[si * num_v_tiles + vi]

    @pl.when(flag == 0)
    def _():
        # Hit-free tile (overwhelmingly common): pure -1 fill, store-bound only.
        out_ref[...] = jnp.full((B, TS, TV), -1.0, dtype=jnp.float32)

    @pl.when(flag != 0)
    def _():
        # Global vocab ids for this tile: (1, 1, TV), broadcast over B and TS.
        v_idx = vi * TV + jax.lax.broadcasted_iota(jnp.int32, (1, 1, TV), 2)
        val = jnp.full((B, TS, TV), -1.0, dtype=jnp.float32)
        sel_all = sel_ref[...]                                   # (B, TS, T)
        for i in range(T):
            # enumerate(reversed(targets)): iteration i uses targets[T-1-i] and
            # writes value i; later (larger) i overwrites earlier -> the later
            # where naturally wins.  -1 sentinel never matches v_idx >= 0.
            sel = sel_all[:, :, T - 1 - i][..., None]            # (B, TS, 1)
            val = jnp.where(v_idx == sel, jnp.float32(i), val)
        out_ref[...] = val


def mock_masked_lm_forward(x_masked, pad_mask, target_ids, mask_token_id,
                           vocab_size, *, target_block_bytes=8 << 20):
    """x_masked: [B, S] int32 token ids; target_ids: [T, M] int32 (M = #masked)."""
    del pad_mask  # unused by the reference module's forward
    B, S = x_masked.shape
    T = target_ids.shape[0]

    # Glue (index plumbing, O(B*S*T) ints): which masked position is the k-th one
    # (row-major == torch boolean-mask ordering) and which vocab id each target
    # assigns there.  Unmasked positions carry a -1 sentinel so the kernel needs
    # neither a pred_mask input nor a final mask-select pass.
    pred_mask = (x_masked == mask_token_id)
    flat = pred_mask.reshape(-1).astype(jnp.int32)
    k_ex = (jnp.cumsum(flat) - flat).reshape(B, S)               # masked-pos index
    # TODO(synk): if #masked positions exceeds target_ids.shape[1] this gather
    # clamps silently (torch would raise); add a checkify assert if needed.
    sel_tbs = jnp.where(pred_mask[None], target_ids[:, k_ex], -1).astype(jnp.int32)
    sel_ids = jnp.transpose(sel_tbs, (1, 2, 0))                  # (B, S, T)

    TS, TV = _choose_tiles(B, S, vocab_size, target_block_bytes=target_block_bytes)
    TS, TV = _split_for_megacore(B, S, vocab_size, TS, TV)
    num_s = pl.cdiv(S, TS)
    num_v = pl.cdiv(vocab_size, TV)

    # Per (seq-tile, vocab-tile) hit flags (flattened 1D -> cheap SMEM layout).
    s_tile = (jnp.arange(S, dtype=jnp.int32) // TS)[None, None, :]   # (1,1,S)
    flat_idx = jnp.where(pred_mask[None],
                         s_tile * num_v + sel_tbs // TV,
                         num_s * num_v)                              # OOB sentinel
    flags = jnp.zeros((num_s * num_v,), jnp.int32).at[
        flat_idx.reshape(-1)].add(1, mode="drop")

    kernel = functools.partial(_mlm_logits_kernel, num_v_tiles=num_v)
    return pl.pallas_call(
        kernel,
        out_shape=jax.ShapeDtypeStruct((B, S, vocab_size), jnp.float32),
        grid_spec=pltpu.PrefetchScalarGridSpec(
            num_scalar_prefetch=1,
            grid=(num_s, num_v),
            in_specs=[
                # T (full) is the lane dim, so TS only needs to be a multiple of 8.
                pl.BlockSpec((B, TS, T), lambda si, vi, flags: (0, si, 0)),
            ],
            # Lane-dense output block; boundary vocab block clipped on writeback.
            out_specs=pl.BlockSpec((B, TS, TV), lambda si, vi, flags: (0, si, vi)),
        ),
        compiler_params=pltpu.CompilerParams(
            dimension_semantics=("parallel", "parallel"),
            vmem_limit_bytes=48 * 1024 * 1024,
        ),
    )(flags, sel_ids)


def _reference(x_np, target_ids_np, mask_id, V):
    B, S = x_np.shape
    ref = np.full((B, S, V), -1.0, dtype=np.float32)
    pm = x_np == mask_id
    pos = np.argwhere(pm)                    # row-major == torch boolean-mask order
    for i, tgt in enumerate(target_ids_np[::-1]):
        for k, (b, s) in enumerate(pos):
            ref[b, s, tgt[k]] = float(i)
    return ref


if __name__ == "__main__":
    # Synthetic deterministic "tokenizer": fixed mask_token_id and precomputed
    # integer id tables (no string side).
    MASK_ID = 3
    key = jax.random.PRNGKey(0)

    # ---- Test 1: vocab = 128, single tile, hit path + overwrite order ---------
    B, S, V = 2, 8, 128
    x = jax.random.randint(key, (B, S), 0, V, dtype=jnp.int32)
    x = jnp.where(x == MASK_ID, MASK_ID + 1, x)       # keep mask id reserved
    for (b, s) in [(0, 2), (0, 5), (1, 1), (1, 7)]:   # 4 masked positions
        x = x.at[b, s].set(MASK_ID)
    pad_mask = jnp.ones((B, S), dtype=jnp.int32)
    # T=3 targets; targets[0]/[1] collide at the first masked position,
    # exercising last-write-wins semantics.
    target_ids = jnp.array([[10, 20, 30, 40],
                            [10, 55, 66, 77],
                            [5, 6, 7, 8]], dtype=jnp.int32)
    out = jax.block_until_ready(
        mock_masked_lm_forward(x, pad_mask, target_ids, MASK_ID, V))
    assert out.shape == (B, S, V)
    np.testing.assert_allclose(
        np.array(out), _reference(np.array(x), np.array(target_ids), MASK_ID, V),
        rtol=0, atol=0)

    # ---- Test 2: vocab = 300 (not a lane multiple), tiny block budget ----------
    # -> 3 vocab tiles, the middle one hit-free (pl.when skip path), the last one
    # a clipped boundary block; output shape is exactly (B, S, 300), no slice.
    V2 = 300
    key2 = jax.random.PRNGKey(1)
    x2 = jax.random.randint(key2, (B, S), 0, V2, dtype=jnp.int32)
    x2 = jnp.where(x2 == MASK_ID, MASK_ID + 1, x2)
    for (b, s) in [(0, 1), (0, 6), (1, 0), (1, 4)]:
        x2 = x2.at[b, s].set(MASK_ID)
    target_ids2 = jnp.array([[10, 270, 290, 40],
                             [10, 5, 6, 299]], dtype=jnp.int32)
    out2 = jax.block_until_ready(
        mock_masked_lm_forward(x2, pad_mask, target_ids2, MASK_ID, V2,
                               target_block_bytes=4096))
    assert out2.shape == (B, S, V2)
    np.testing.assert_allclose(
        np.array(out2), _reference(np.array(x2), np.array(target_ids2), MASK_ID, V2),
        rtol=0, atol=0)

    # ---- Test 3: seq tiled (TS=8 < S=16), full vocab per block -----------------
    # Second seq tile has no masked positions -> hit-free skip path along seq;
    # exercises the sublane-only (multiple-of-8) TS layout on sel_ids.
    S3, V3 = 16, 256
    key3 = jax.random.PRNGKey(2)
    x3 = jax.random.randint(key3, (B, S3), 0, V3, dtype=jnp.int32)
    x3 = jnp.where(x3 == MASK_ID, MASK_ID + 1, x3)
    for (b, s) in [(0, 2), (0, 7), (1, 3), (1, 5)]:   # all in the first seq tile
        x3 = x3.at[b, s].set(MASK_ID)
    pad_mask3 = jnp.ones((B, S3), dtype=jnp.int32)
    target_ids3 = jnp.array([[100, 7, 250, 33],
                             [100, 200, 5, 255]], dtype=jnp.int32)
    out3 = jax.block_until_ready(
        mock_masked_lm_forward(x3, pad_mask3, target_ids3, MASK_ID, V3,
                               target_block_bytes=16384))
    assert out3.shape == (B, S3, V3)
    np.testing.assert_allclose(
        np.array(out3), _reference(np.array(x3), np.array(target_ids3), MASK_ID, V3),
        rtol=0, atol=0)

    print("KERNEL_OK")
</pallas_src>

<mosaic_0001>
module attributes {stable_mosaic.version = 11 : i64} {
  func.func @_mlm_logits_kernel(%arg0: i32, %arg1: i32, %arg2: memref<1xi32, #tpu.memory_space<smem>>, %arg3: memref<2x8x3xi32, #tpu.memory_space<vmem>>, %arg4: memref<2x8x128xf32, #tpu.memory_space<vmem>>) attributes {dimension_semantics = [#tpu.dimension_semantics<parallel>, #tpu.dimension_semantics<parallel>], iteration_bounds = array<i64: 1, 1>, scalar_prefetch = 1 : i64, scratch_operands = 0 : i64, tpu.core_type = #tpu.core_type<tc>, window_params = [{transform_indices = @transform_0, window_bounds = array<i64: 2, 8, 3>}, {transform_indices = @transform_1, window_bounds = array<i64: 2, 8, 128>}]} {
    %c1_i32 = arith.constant 1 : i32
    %0 = arith.muli %arg0, %c1_i32 : i32
    %1 = arith.addi %0, %arg1 : i32
    %2 = arith.index_cast %1 : i32 to index
    %3 = memref.load %arg2[%2] : memref<1xi32, #tpu.memory_space<smem>>
    %c0_i32 = arith.constant 0 : i32
    %4 = arith.cmpi eq, %3, %c0_i32 : i32
    %5 = arith.extui %4 : i1 to i32
    %c0_i32_0 = arith.constant 0 : i32
    %6 = arith.cmpi ne, %5, %c0_i32_0 : i32
    scf.if %6 {
      %cst = arith.constant -1.000000e+00 : f32
      %10 = vector.broadcast %cst : f32 to vector<2x8x128xf32>
      %c0 = arith.constant 0 : index
      %c0_3 = arith.constant 0 : index
      %c0_4 = arith.constant 0 : index
      %11 = vector.load %arg4[%c0, %c0_3, %c0_4] : memref<2x8x128xf32, #tpu.memory_space<vmem>>, vector<2x8x128xf32>
      tpu.vector_store %arg4[%c0, %c0_3, %c0_4], %10 {strides = array<i32>} : memref<2x8x128xf32, #tpu.memory_space<vmem>>, vector<2x8x128xf32>,
    } else {
    }
    %c0_i32_1 = arith.constant 0 : i32
    %7 = arith.cmpi ne, %3, %c0_i32_1 : i32
    %8 = arith.extui %7 : i1 to i32
    %c0_i32_2 = arith.constant 0 : i32
    %9 = arith.cmpi ne, %8, %c0_i32_2 : i32
    scf.if %9 {
      %c128_i32 = arith.constant 128 : i32
      %10 = arith.muli %arg1, %c128_i32 : i32
      %11 = tpu.iota {dimensions = array<i32: 2>} : vector<1x1x128xi32>
      %12 = vector.broadcast %10 : i32 to vector<1x1x128xi32>
      %13 = arith.addi %12, %11 : vector<1x1x128xi32>
      %cst = arith.constant -1.000000e+00 : f32
      %14 = vector.broadcast %cst : f32 to vector<2x8x128xf32>
      %c0 = arith.constant 0 : index
      %c0_3 = arith.constant 0 : index
      %c0_4 = arith.constant 0 : index
      %15 = vector.load %arg3[%c0, %c0_3, %c0_4] : memref<2x8x3xi32, #tpu.memory_space<vmem>>, vector<2x8x3xi32>
      %16 = vector.extract_strided_slice %15 {offsets = [0, 0, 2], sizes = [2, 8, 1], strides = [1, 1, 1]} : vector<2x8x3xi32> to vector<2x8x1xi32>
      %17 = vector.shape_cast %16 : vector<2x8x1xi32> to vector<2x8xi32>
      %18 = vector.shape_cast %17 : vector<2x8xi32> to vector<2x8x1xi32>
      %19 = vector.broadcast %13 : vector<1x1x128xi32> to vector<2x8x128xi32>
      %20 = vector.broadcast %18 : vector<2x8x1xi32> to vector<2x8x128xi32>
      %21 = arith.cmpi eq, %19, %20 : vector<2x8x128xi32>
      %cst_5 = arith.constant 0.000000e+00 : f32
      %22 = vector.broadcast %cst_5 : f32 to vector<2x8x128xf32>
      %23 = arith.select %21, %22, %14 : vector<2x8x128xi1>, vector<2x8x128xf32>
      %24 = vector.extract_strided_slice %15 {offsets = [0, 0, 1], sizes = [2, 8, 1], strides = [1, 1, 1]} : vector<2x8x3xi32> to vector<2x8x1xi32>
      %25 = vector.shape_cast %24 : vector<2x8x1xi32> to vector<2x8xi32>
      %26 = vector.shape_cast %25 : vector<2x8xi32> to vector<2x8x1xi32>
      %27 = vector.broadcast %13 : vector<1x1x128xi32> to vector<2x8x128xi32>
      %28 = vector.broadcast %26 : vector<2x8x1xi32> to vector<2x8x128xi32>
      %29 = arith.cmpi eq, %27, %28 : vector<2x8x128xi32>
      %cst_6 = arith.constant 1.000000e+00 : f32
      %30 = vector.broadcast %cst_6 : f32 to vector<2x8x128xf32>
      %31 = arith.select %29, %30, %23 : vector<2x8x128xi1>, vector<2x8x128xf32>
      %32 = vector.extract_strided_slice %15 {offsets = [0, 0, 0], sizes = [2, 8, 1], strides = [1, 1, 1]} : vector<2x8x3xi32> to vector<2x8x1xi32>
      %33 = vector.shape_cast %32 : vector<2x8x1xi32> to vector<2x8xi32>
      %34 = vector.shape_cast %33 : vector<2x8xi32> to vector<2x8x1xi32>
      %35 = vector.broadcast %13 : vector<1x1x128xi32> to vector<2x8x128xi32>
      %36 = vector.broadcast %34 : vector<2x8x1xi32> to vector<2x8x128xi32>
      %37 = arith.cmpi eq, %35, %36 : vector<2x8x128xi32>
      %cst_7 = arith.constant 2.000000e+00 : f32
      %38 = vector.broadcast %cst_7 : f32 to vector<2x8x128xf32>
      %39 = arith.select %37, %38, %31 : vector<2x8x128xi1>, vector<2x8x128xf32>
      %c0_8 = arith.constant 0 : index
      %c0_9 = arith.constant 0 : index
      %c0_10 = arith.constant 0 : index
      %40 = vector.load %arg4[%c0_8, %c0_9, %c0_10] : memref<2x8x128xf32, #tpu.memory_space<vmem>>, vector<2x8x128xf32>
      tpu.vector_store %arg4[%c0_8, %c0_9, %c0_10], %39 {strides = array<i32>} : memref<2x8x128xf32, #tpu.memory_space<vmem>>, vector<2x8x128xf32>,
    } else {
    }
    return
  }
  func.func @transform_0(%arg0: i32, %arg1: i32, %arg2: memref<1xi32, #tpu.memory_space<smem>>) -> (i32, i32, i32) {
    %c0_i32 = arith.constant 0 : i32
    %c0_i32_0 = arith.constant 0 : i32
    %c0_i32_1 = arith.constant 0 : i32
    return %c0_i32, %arg0, %c0_i32_0 : i32, i32, i32
  }
  func.func @transform_1(%arg0: i32, %arg1: i32, %arg2: memref<1xi32, #tpu.memory_space<smem>>) -> (i32, i32, i32) {
    %c0_i32 = arith.constant 0 : i32
    %c0_i32_0 = arith.constant 0 : i32
    return %c0_i32, %arg0, %arg1 : i32, i32, i32
  }
}

</mosaic_0001>

<llo_original>
// kernel: tpu_custom_call.1
$region0: #{tpu_custom_call.1}
  #allocation0 [shape = 'u32[]', space=smem, size = 0x4, offset = 0x4, fixed_abs, tag = 'smem constant byte address 0x4 - core index']
  #allocation1 [shape = 'u32[144,128]{1,0:T(1,128)}', space=vmem, size = 0x12000, scoped, tag = 'internal scratch']
  #allocation2 [shape = 's32[1]{0}', space=sflag, size = 0x4, scoped, tag = 'scoped memory for tpu_custom_call.1']
  #allocation3 [shape = 's32[1]{0:T(128)S(6)}', space=smem, size = 0x200, scoped, tag = 'prefetched SMEM operand 0']
  %s0 = inlined_call_operand.<no memory space> [shape: s32[1], index: 0, kind: input, shape index: {}]
  %s1 = inlined_call_operand.vmem [shape: s32[2,8,3], index: 1, kind: input, shape index: {}]
  %s2 = inlined_call_operand.hbm [shape: f32[2,8,128], index: 2, kind: output, shape index: {}]
  %s3 = sld [smem:[#allocation0]]
  $region22: #{tpu_custom_call.1} parent=0
    _
  %s5 = ssub.s32 1, %s3
  %s6 = scalar_select 0, %s5, %s3
  %7 = sst [smem:[#allocation3]] %s0
  $region1: #{tpu_custom_call.1} parent=0
    #allocation4 [shape = 'u8[8192]{0}', space=vmem, size = 0x2000, scoped, tag = 'output window, operand 0, single buffered']
    #allocation5 [shape = 's32[1]{0}', space=sflag, size = 0x4, scoped, tag = 'scoped memory for tpu_custom_call.1']
    %8 = vsyncpa [#allocation5], 0
    // Predicated region
    $region2: #{tpu_custom_call.1} parent=1 // pred_check
      _
    $region3: #{tpu_custom_call.1} parent=1 // pred_check_branch
      %10 = sbr.rel (0) target = $region5
    $region4: #{tpu_custom_call.1} parent=1 // pred_region
      _
    $region5: #{tpu_custom_call.1} parent=1 // pred_fallthru
      _
    %s11 = sadd.s32 0, 0
    %s12 = sld [smem:[#allocation3 + %s11]]
    %p13 = scmp.eq.s32.totalorder %s12, 0
    // Predicated region
    $region6: #{tpu_custom_call.1} parent=1 // pred_check
      %p14 = pneg %p13
    $region7: #{tpu_custom_call.1} parent=1 // pred_check_branch
      %16 = sbr.rel (%p14) target = $region9
    $region8: #{tpu_custom_call.1} parent=1 // pred_region
      %17 = vst [vmem:[#allocation4] sm:$0xff] -1.0
      %18 = vst [vmem:[#allocation4 + $0x8] sm:$0xff] -1.0
    $region9: #{tpu_custom_call.1} parent=1 // pred_fallthru
      _
    %p19 = scmp.ne.s32.totalorder %s12, 0
    // Predicated region
    $region10: #{tpu_custom_call.1} parent=1 // pred_check
      %p20 = pneg %p19
    $region11: #{tpu_custom_call.1} parent=1 // pred_check_branch
      %22 = sbr.rel (%p20) target = $region13
    $region12: #{tpu_custom_call.1} parent=1 // pred_region
      %s23 = smul.u32 0, 128
      %v24 = vlaneseq
      %v25 = vand.u32 %v24, 127
      %v26 = vstv %s23
      %v27 = vadd.s32 %v26, %v25
      %v28 = vld [vmem:[%s1] sm:$0xff]
      %v29 = vld [vmem:[%s1 + $0x8] sm:$0xff]
      %30 = vset.pattern.permute.xlu0 2
      %31 = vperm.xlu0 %30, %v28
      %v32 = vpop.permute.xlu0 %31
      %33 = vset.pattern.permute.xlu0 2
      %34 = vperm.xlu0 %33, %v29
      %v35 = vpop.permute.xlu0 %34
      %vm36 = vcmp.eq.s32.totalorder %v27, %v32
      %vm37 = vcmp.eq.s32.totalorder %v27, %v35
      %v38 = vsel %vm36, 0.0, -1.0
      %v39 = vsel %vm37, 0.0, -1.0
      %40 = vset.pattern.permute.xlu0 1
      %41 = vperm.xlu0 %40, %v28
      %v42 = vpop.permute.xlu0 %41
      %43 = vset.pattern.permute.xlu0 1
      %44 = vperm.xlu0 %43, %v29
      %v45 = vpop.permute.xlu0 %44
      %vm46 = vcmp.eq.s32.totalorder %v27, %v42
      %vm47 = vcmp.eq.s32.totalorder %v27, %v45
      %v48 = vsel %vm46, 1.0, %v38
      %v49 = vsel %vm47, 1.0, %v39
      %50 = vset.pattern.permute.xlu0 0
      %51 = vperm.xlu0 %50, %v28
      %v52 = vpop.permute.xlu0 %51
      %53 = vset.pattern.permute.xlu0 0
      %54 = vperm.xlu0 %53, %v29
      %v55 = vpop.permute.xlu0 %54
      %vm56 = vcmp.eq.s32.totalorder %v27, %v52
      %vm57 = vcmp.eq.s32.totalorder %v27, %v55
      %v58 = vsel %vm56, 2.0, %v48
      %v59 = vsel %vm57, 2.0, %v49
      %60 = vst [vmem:[#allocation4] sm:$0xff] %v58
      %61 = vst [vmem:[#allocation4 + $0x8] sm:$0xff] %v59
    $region13: #{tpu_custom_call.1} parent=1 // pred_fallthru
      _
    // Predicated region
    $region14: #{tpu_custom_call.1} parent=1 // pred_check
      _
    $region15: #{tpu_custom_call.1} parent=1 // pred_check_branch
      %63 = sbr.rel (0) target = $region17
    $region16: #{tpu_custom_call.1} parent=1 // pred_region
      %s65 = ssub.s32 256, 256
      %66 = vsyncadd [#allocation5], %s65
      %s67 = sshll.u32 [#allocation4], 4
      %s68 = int_to_ptr.vmem [resolvable:$true] %s67
      %73 = dma.vmem_to_hbm [thread:$0]  %s68, 256, %s2, [#allocation5], 128, 128, 8
    $region17: #{tpu_custom_call.1} parent=1 // pred_fallthru
      _
    // Predicated region
    $region18: #{tpu_custom_call.1} parent=1 // pred_check
      _
    $region19: #{tpu_custom_call.1} parent=1 // pred_check_branch
      %75 = sbr.rel (0) target = $region21
    $region20: #{tpu_custom_call.1} parent=1 // pred_region
      %76 = dma.done [#allocation5], 256
    $region21: #{tpu_custom_call.1} parent=1 // pred_fallthru
      _
    %77 = vsyncpa [#allocation5], 1

</llo_original>
